<compile_context>
chip_gen: v5e
topology: v5e:2x2
jax: 0.10.0
libtpu: 0.0.40
codegen_flags: <defaults>
</compile_context>

<pallas_src>
import math

import jax
import jax.numpy as jnp
from jax.experimental import pallas as pl
from jax.experimental.pallas import tpu as pltpu


_VMEM_LIMIT_BYTES = 48 * 1024 * 1024     # fits v7x (64 MiB phys), ample on v5e/v6e
_BATCH_VMEM_BUDGET = 24 * 1024 * 1024    # budget for one double-buffered batch block
_NOMINAL_T = 8                           # nominal seq length for the batch-block heuristic


# --------------------------------------------------------------- utilities --

def _round_up(x, m):
    return ((x + m - 1) // m) * m


def _pad_to(arr, target_shape):
    pads = [(0, t - s) for s, t in zip(arr.shape, target_shape)]
    if any(p[1] for p in pads):
        arr = jnp.pad(arr, pads)
    return arr


def _pick_tile(dim_padded, pref, align=128):
    """Largest multiple of `align` <= pref that divides dim_padded (or full dim)."""
    if dim_padded <= pref:
        return dim_padded
    best, t = align, align
    while t <= pref:
        if dim_padded % t == 0:
            best = t
        t += align
    return best


# ------------------------------------------------------------------ kernels --

def _batched_linear_kernel(x_ref, w_ref, b_ref, o_ref):
    """Per-example linear: o[b] = x[b] @ w[b] + bias[b].

    x_ref: (bb, T, INp)   w_ref: (bb, INp, tn)   b_ref: (bb, 1, tn)  (f32)
    o_ref: (bb, T, tn)    (f32)
    Contraction is x-last-dim against w-sublane-dim: no in-kernel transpose,
    output lane axis = OUT (lane-dense stores).  MXU accumulates in f32.
    """
    acc = jnp.einsum("bti,bio->bto", x_ref[...], w_ref[...],
                     preferred_element_type=jnp.float32)
    o_ref[...] = (acc + b_ref[...]).astype(o_ref.dtype)


def _shared_linear_kernel(x_ref, w_ref, b_ref, o_ref):
    """Shared-weight linear, (M, N, K) tiled, accumulating directly in o_ref.

    x_ref: (tm, tk)   w_ref: (tk, tn)   b_ref: (1, tn)   o_ref: (tm, tn) f32.
    o_ref's index_map ignores k, so the f32 output tile stays resident across
    the K ("arbitrary") axis; it is initialized with the broadcast bias at
    k == 0 (no scratch accumulator, no finalize copy).
    """
    @pl.when(pl.program_id(2) == 0)
    def _():
        o_ref[...] = jnp.broadcast_to(b_ref[...], o_ref.shape).astype(o_ref.dtype)

    o_ref[...] += jnp.dot(x_ref[...], w_ref[...],
                          preferred_element_type=jnp.float32).astype(o_ref.dtype)


# ----------------------------------------------------------------- wrappers --

def batched_linear(x, w_comp, b_comp, out_features, *, bb, tn, compute_dtype):
    """x: [B, T, IN]; w_comp: [Bp, INp, OUTp] (compute dtype, pre-padded);
    b_comp: [Bp, 1, OUTp] f32  ->  [B, T, OUT] f32."""
    B, T, _ = x.shape
    Bp, INp, OUTp = w_comp.shape
    itemsize = jnp.dtype(compute_dtype).itemsize

    xp = _pad_to(x.astype(compute_dtype), (Bp, T, INp))

    b_grid = Bp // bb
    n_grid = OUTp // tn

    out = pl.pallas_call(
        _batched_linear_kernel,
        out_shape=jax.ShapeDtypeStruct((Bp, T, OUTp), jnp.float32),
        grid=(b_grid, n_grid),
        in_specs=[
            pl.BlockSpec((bb, T, INp), lambda b, n: (b, 0, 0)),
            pl.BlockSpec((bb, INp, tn), lambda b, n: (b, 0, n)),
            pl.BlockSpec((bb, 1, tn), lambda b, n: (b, 0, n)),
        ],
        out_specs=pl.BlockSpec((bb, T, tn), lambda b, n: (b, 0, n)),
        compiler_params=pltpu.CompilerParams(
            dimension_semantics=("parallel", "parallel"),
            vmem_limit_bytes=_VMEM_LIMIT_BYTES),
        cost_estimate=pl.CostEstimate(
            flops=2 * Bp * T * INp * OUTp,
            transcendentals=0,
            bytes_accessed=(Bp * INp * OUTp * itemsize        # weights (streamed once)
                            + n_grid * Bp * T * INp * itemsize  # x (re-read per N block)
                            + Bp * OUTp * 4                     # bias
                            + Bp * T * OUTp * 4)),              # output
    )(xp, w_comp, b_comp)
    return out[:B, :, :out_features]


def shared_linear(x2d, w_comp, b_comp, out_features, *, tk, tn, compute_dtype):
    """x2d: [M, IN]; w_comp: [INp, OUTp] (compute dtype, pre-padded);
    b_comp: [1, OUTp] f32  ->  [M, OUT] f32."""
    M, _ = x2d.shape
    INp, OUTp = w_comp.shape
    itemsize = jnp.dtype(compute_dtype).itemsize

    tm = min(256, _round_up(M, 8))
    Mp = _round_up(M, tm)

    # Megacore (v7x has 2 TCs): make sure at least one "parallel" grid axis has
    # >= 2 steps when the problem allows it.
    if Mp // tm == 1 and OUTp // tn == 1 and OUTp > 128:
        tn = _pick_tile(OUTp, max(128, OUTp // 2))

    grid_m, grid_n, grid_k = Mp // tm, OUTp // tn, INp // tk

    xp = _pad_to(x2d.astype(compute_dtype), (Mp, INp))

    out = pl.pallas_call(
        _shared_linear_kernel,
        out_shape=jax.ShapeDtypeStruct((Mp, OUTp), jnp.float32),
        grid_spec=pltpu.PrefetchScalarGridSpec(
            num_scalar_prefetch=0,
            grid=(grid_m, grid_n, grid_k),
            in_specs=[
                pl.BlockSpec((tm, tk), lambda i, j, k: (i, k)),
                pl.BlockSpec((tk, tn), lambda i, j, k: (k, j)),
                pl.BlockSpec((1, tn), lambda i, j, k: (0, j)),
            ],
            out_specs=pl.BlockSpec((tm, tn), lambda i, j, k: (i, j)),
        ),
        compiler_params=pltpu.CompilerParams(
            dimension_semantics=("parallel", "parallel", "arbitrary"),
            vmem_limit_bytes=_VMEM_LIMIT_BYTES),
        cost_estimate=pl.CostEstimate(
            flops=2 * Mp * OUTp * INp,
            transcendentals=0,
            bytes_accessed=(grid_n * Mp * INp * itemsize        # x re-read per N block
                            + grid_m * INp * OUTp * itemsize    # w re-read per M block
                            + OUTp * 4
                            + Mp * OUTp * 4)),
    )(xp, w_comp, b_comp)
    return out[:M, :out_features]


# ------------------------------------------------------------------- module --

class Linear:
    """JAX/Pallas port of DPGGAN Linear (per-example weights when batch_size)."""

    def __init__(self, in_features, out_features, bias=True, batch_size=None,
                 *, key, compute_dtype=jnp.bfloat16, max_block_b=16):
        self.in_features = in_features
        self.out_features = out_features
        self.batch_size = batch_size
        self._compute_dtype = compute_dtype

        if batch_size is not None:
            w_shape = (batch_size, out_features, in_features)
            b_shape = (batch_size, out_features)
        else:
            w_shape = (out_features, in_features)
            b_shape = (out_features,)

        # PyTorch reset_parameters: stdv = 1 / sqrt(weight.size(1))
        # (for batched weights, size(1) == out_features — quirk reproduced).
        stdv = 1.0 / math.sqrt(w_shape[1])
        kw, kb = jax.random.split(key)
        self.weight = jax.random.uniform(
            kw, w_shape, dtype=jnp.float32, minval=-stdv, maxval=stdv)
        if bias:
            self.bias = jax.random.uniform(
                kb, b_shape, dtype=jnp.float32, minval=-stdv, maxval=stdv)
        else:
            self.bias = None

        # ----- one-time transpose / pad / cast of the compute weights -----
        INp = _round_up(in_features, 128)
        OUTp = _round_up(out_features, 128)
        self._INp, self._OUTp = INp, OUTp
        w_t = jnp.swapaxes(self.weight, -1, -2)       # contract on W's sublane dim

        if batch_size is not None:
            B = batch_size
            itemsize = jnp.dtype(compute_dtype).itemsize
            per_ex = (itemsize * INp * OUTp            # per-example weight block
                      + itemsize * _NOMINAL_T * INp    # x block (nominal T)
                      + 4 * _NOMINAL_T * OUTp          # out block
                      + 4 * OUTp)                      # bias block
            if 2 * per_ex > _BATCH_VMEM_BUDGET:
                # One example's full weight doesn't fit the budget: tile OUT.
                bb = 1
                tn, t = 128, 128
                while t <= OUTp:
                    if (OUTp % t == 0 and
                            2 * (itemsize * INp * t + itemsize * _NOMINAL_T * INp
                                 + 4 * _NOMINAL_T * t + 4 * t) <= _BATCH_VMEM_BUDGET):
                        tn = t
                    t += 128
                # TODO(synk): K-tiling fallback if even (INp, 128) overflows VMEM.
            else:
                tn = OUTp
                bb = max(1, min(max_block_b, B, _BATCH_VMEM_BUDGET // (2 * per_ex)))
                # Keep >= ~4 grid steps so the weight DMA double-buffers and both
                # v7x TensorCores get work even for modest B.
                min_steps = min(4, B)
                bb = max(1, min(bb, max(1, B // min_steps)))
            Bp = _round_up(B, bb)
            self._bb, self._tn_b, self._Bp = bb, tn, Bp

            self._w_comp = _pad_to(w_t, (Bp, INp, OUTp)).astype(compute_dtype)
            b_full = self.bias if self.bias is not None else jnp.zeros(
                (B, out_features), jnp.float32)
            self._b_comp = _pad_to(b_full.reshape(B, 1, out_features),
                                   (Bp, 1, OUTp)).astype(jnp.float32)
        else:
            self._tk = _pick_tile(INp, 1024)
            self._tn = _pick_tile(OUTp, 512)
            self._w_comp = _pad_to(w_t, (INp, OUTp)).astype(compute_dtype)
            b_full = self.bias if self.bias is not None else jnp.zeros(
                (out_features,), jnp.float32)
            self._b_comp = _pad_to(b_full.reshape(1, out_features),
                                   (1, OUTp)).astype(jnp.float32)

    def __call__(self, x, for_test=False):
        if x.ndim == 2 and (not for_test):
            x = x.reshape(x.shape[0], 1, x.shape[1])

        if self.batch_size is not None:
            squeeze = False
            if x.ndim == 2:  # only reachable with for_test=True
                x = x[:, None, :]
                squeeze = True
            out = batched_linear(x, self._w_comp, self._b_comp, self.out_features,
                                 bb=self._bb, tn=self._tn_b,
                                 compute_dtype=self._compute_dtype)
            return out[:, 0, :] if squeeze else out

        # shared-weight path (batch_size=None): standard F.linear
        lead = x.shape[:-1]
        x2d = x.reshape(-1, self.in_features)
        out2d = shared_linear(x2d, self._w_comp, self._b_comp, self.out_features,
                              tk=self._tk, tn=self._tn,
                              compute_dtype=self._compute_dtype)
        return out2d.reshape(*lead, self.out_features)


# --------------------------------------------------------------------- main --

if __name__ == "__main__":
    key = jax.random.PRNGKey(0)
    keys = jax.random.split(key, 6)

    # --- small per-example-weight path (batch_size given), 2-D input ---
    B, IN, OUT = 4, 32, 16
    x = jax.random.normal(keys[0], (B, IN), dtype=jnp.float32)

    lin_batched = Linear(IN, OUT, bias=True, batch_size=B, key=keys[1])
    y_batched = lin_batched(x)                       # [B, 1, OUT]
    jax.block_until_ready(y_batched)
    ref_batched = (jnp.einsum("bti,boi->bto",
                              x.reshape(B, 1, IN), lin_batched.weight)
                   + lin_batched.bias[:, None, :])
    assert y_batched.shape == (B, 1, OUT)
    assert jnp.allclose(y_batched, ref_batched, atol=2e-2, rtol=2e-2)

    # --- small shared-weight path (batch_size=None) ---
    lin_shared = Linear(IN, OUT, bias=True, batch_size=None, key=keys[2])
    y_shared = lin_shared(x)                         # [B, 1, OUT]
    jax.block_until_ready(y_shared)
    ref_shared = (x.reshape(B, 1, IN) @ lin_shared.weight.T
                  + lin_shared.bias)
    assert y_shared.shape == (B, 1, OUT)
    assert jnp.allclose(y_shared, ref_shared, atol=2e-2, rtol=2e-2)

    # --- larger per-example path exercising batch blocking (bb=4, grid=(4,1)) ---
    B2, T2, IN2, OUT2 = 16, 4, 96, 48
    x2 = jax.random.normal(keys[3], (B2, T2, IN2), dtype=jnp.float32)
    lin_b2 = Linear(IN2, OUT2, bias=True, batch_size=B2, key=keys[4])
    y_b2 = lin_b2(x2)
    jax.block_until_ready(y_b2)
    ref_b2 = (jnp.einsum("bti,boi->bto", x2, lin_b2.weight)
              + lin_b2.bias[:, None, :])
    assert y_b2.shape == (B2, T2, OUT2)
    assert jnp.allclose(y_b2, ref_b2, atol=2e-2, rtol=2e-2)

    # --- larger shared path exercising the (M, N, K) tiled grid (N split for
    #     megacore since M fits one tile) ---
    M3, IN3, OUT3 = 64, 1024, 256
    x3 = jax.random.normal(keys[5], (M3, IN3), dtype=jnp.float32)
    lin_s3 = Linear(IN3, OUT3, bias=True, batch_size=None, key=keys[1])
    y_s3 = lin_s3(x3, for_test=True)                 # stays 2-D
    jax.block_until_ready(y_s3)
    ref_s3 = (jnp.matmul(x3, lin_s3.weight.T,
                         precision=jax.lax.Precision.HIGHEST)
              + lin_s3.bias)
    assert y_s3.shape == (M3, OUT3)
    assert jnp.allclose(y_s3, ref_s3, atol=5e-2, rtol=5e-2)

    print("KERNEL_OK")
</pallas_src>

<mosaic_0001>
module attributes {stable_mosaic.version = 11 : i64} {
  func.func @_batched_linear_kernel(%arg0: i32, %arg1: i32, %arg2: memref<1x1x128xbf16, #tpu.memory_space<vmem>>, %arg3: memref<1x128x128xbf16, #tpu.memory_space<vmem>>, %arg4: memref<1x1x128xf32, #tpu.memory_space<vmem>>, %arg5: memref<1x1x128xf32, #tpu.memory_space<vmem>>) attributes {dimension_semantics = [#tpu.dimension_semantics<parallel>, #tpu.dimension_semantics<parallel>], iteration_bounds = array<i64: 4, 1>, scalar_prefetch = 0 : i64, scratch_operands = 0 : i64, tpu.core_type = #tpu.core_type<tc>, window_params = [{transform_indices = @transform_0, window_bounds = array<i64: 1, 1, 128>}, {transform_indices = @transform_1, window_bounds = array<i64: 1, 128, 128>}, {transform_indices = @transform_2, window_bounds = array<i64: 1, 1, 128>}, {transform_indices = @transform_3, window_bounds = array<i64: 1, 1, 128>}]} {
    %c0 = arith.constant 0 : index
    %c0_0 = arith.constant 0 : index
    %c0_1 = arith.constant 0 : index
    %0 = vector.load %arg2[%c0, %c0_0, %c0_1] : memref<1x1x128xbf16, #tpu.memory_space<vmem>>, vector<1x1x128xbf16>
    %c0_2 = arith.constant 0 : index
    %c0_3 = arith.constant 0 : index
    %c0_4 = arith.constant 0 : index
    %1 = vector.load %arg3[%c0_2, %c0_3, %c0_4] : memref<1x128x128xbf16, #tpu.memory_space<vmem>>, vector<1x128x128xbf16>
    "tpu.trace_start"() <{level = 10 : i32, message = "bti,bio->bto"}> : () -> ()
    %cst = arith.constant dense<0.000000e+00> : vector<1x1x128xf32>
    %2 = tpu.matmul %0, %1, %cst {dimension_numbers = #tpu.dot_dimension_numbers<[2], [1], [1], [2], [0, 0, 0, 1, 1, 2], [0], [0]>} : vector<1x1x128xbf16>, vector<1x128x128xbf16>, vector<1x1x128xf32> -> vector<1x1x128xf32>
    "tpu.trace_stop"() : () -> ()
    %c0_5 = arith.constant 0 : index
    %c0_6 = arith.constant 0 : index
    %c0_7 = arith.constant 0 : index
    %3 = vector.load %arg4[%c0_5, %c0_6, %c0_7] : memref<1x1x128xf32, #tpu.memory_space<vmem>>, vector<1x1x128xf32>
    %4 = arith.addf %2, %3 : vector<1x1x128xf32>
    %c0_8 = arith.constant 0 : index
    %c0_9 = arith.constant 0 : index
    %c0_10 = arith.constant 0 : index
    %5 = vector.load %arg5[%c0_8, %c0_9, %c0_10] : memref<1x1x128xf32, #tpu.memory_space<vmem>>, vector<1x1x128xf32>
    tpu.vector_store %arg5[%c0_8, %c0_9, %c0_10], %4 {strides = array<i32>} : memref<1x1x128xf32, #tpu.memory_space<vmem>>, vector<1x1x128xf32>,
    return
  }
  func.func @transform_0(%arg0: i32, %arg1: i32) -> (i32, i32, i32) {
    %c0_i32 = arith.constant 0 : i32
    %c0_i32_0 = arith.constant 0 : i32
    %c0_i32_1 = arith.constant 0 : i32
    return %arg0, %c0_i32, %c0_i32_0 : i32, i32, i32
  }
  func.func @transform_1(%arg0: i32, %arg1: i32) -> (i32, i32, i32) {
    %c0_i32 = arith.constant 0 : i32
    %c0_i32_0 = arith.constant 0 : i32
    return %arg0, %c0_i32, %arg1 : i32, i32, i32
  }
  func.func @transform_2(%arg0: i32, %arg1: i32) -> (i32, i32, i32) {
    %c0_i32 = arith.constant 0 : i32
    %c0_i32_0 = arith.constant 0 : i32
    return %arg0, %c0_i32, %arg1 : i32, i32, i32
  }
  func.func @transform_3(%arg0: i32, %arg1: i32) -> (i32, i32, i32) {
    %c0_i32 = arith.constant 0 : i32
    %c0_i32_0 = arith.constant 0 : i32
    return %arg0, %c0_i32, %arg1 : i32, i32, i32
  }
}

</mosaic_0001>

<llo_original>
// kernel: tpu_custom_call.1
$region0: #{tpu_custom_call.1}
  #allocation0 [shape = 'u32[]', space=smem, size = 0x4, offset = 0x4, fixed_abs, tag = 'smem constant byte address 0x4 - core index']
  #allocation1 [shape = 'u32[72,128]{1,0:T(1,128)}', space=vmem, size = 0x9000, scoped, tag = 'internal scratch']
  %s0 = inlined_call_operand.vmem [shape: bf16[4,1,128], index: 0, kind: input, shape index: {}]
  %s1 = inlined_call_operand.hbm [shape: bf16[4,128,128], index: 1, kind: input, shape index: {}]
  %s2 = inlined_call_operand.vmem [shape: f32[4,1,128], index: 2, kind: input, shape index: {}]
  %s3 = inlined_call_operand.hbm [shape: f32[4,1,128], index: 3, kind: output, shape index: {}]
  %s4 = sld [smem:[#allocation0]]
  $region49: #{tpu_custom_call.1} parent=0
    _
  %s6 = ssub.s32 1, %s4
  %s7 = scalar_select 0, %s6, %s4
  $region1: #{tpu_custom_call.1} parent=0
    #allocation2 [shape = 'u8[65536]{0}', space=vmem, size = 0x10000, scoped, tag = 'input window, operand 1']
    #allocation3 [shape = 's32[2]{0}', space=sflag, size = 0x8, scoped, tag = 'scoped memory for tpu_custom_call.1']
    #allocation4 [shape = 's32[2]{0}', space=sflag, size = 0x8, scoped, tag = 'scoped memory for tpu_custom_call.1']
    #allocation5 [shape = 'u8[1024]{0}', space=vmem, size = 0x400, scoped, tag = 'output window, operand 0']
    %8 = vsyncpa [#allocation3], 0
    %s9 = scalar_lea.sflag [#allocation3], 1
    %10 = vsyncpa %s9, 0
    %11 = vsyncpa [#allocation4], 0
    %s12 = scalar_lea.sflag [#allocation4], 1
    %13 = vsyncpa %s12, 0
    loop: start=0, step=1, limit=6
    $region2: #{tpu_custom_call.1} parent=1 // loop_pre_header
      _
    $region3: #{tpu_custom_call.1} parent=1 // loop_header
      %s15 = sphi 0, %s19
      %p16 = scmp.ge.s32.totalorder %s15, 6
      %s22 = sphi 0, %s34
      %s23 = sphi 0, %s30
      %s24 = sphi 0, %s22
      %s25 = sphi 0, %s23
      %s26 = sphi 0, %s24
      %s27 = sphi 0, %s25
      %s37 = sphi 0, %s39
      %s40 = sphi 0, %s37
      %s41 = sphi 0, %s40
      %s57 = sphi 0, %s41
      %s65 = sphi 0, %s67
      %s68 = sphi 0, %s65
      %s69 = sphi 0, %s68
      %s85 = sphi 0, %s69
      %s93 = sphi 0, %s95
      %s96 = sphi 0, %s93
      %s97 = sphi 0, %s96
      %s113 = sphi 0, %s97
      %s121 = sphi 0, %s123
      %s124 = sphi 0, %s121
      %s125 = sphi 0, %s124
      %s141 = sphi 0, %s125
    $region4: #{tpu_custom_call.1} parent=1 // loop_header_branch
      %18 = sbr.rel (%p16) target = $region8
    $region5: #{tpu_custom_call.1} parent=1 // loop_body
      %s20 = ssub.s32 %s15, 1
      %s21 = ssub.s32 %s15, 2
      %s28 = sadd.s32 1, %s23
      %p29 = scmp.ge.s32.totalorder %s28, 1
      %s30 = scalar_select %p29, 0, %s28
      %s31 = sadd.s32 1, %s22
      %s32 = scalar_select %p29, %s31, %s22
      %p33 = scmp.ge.s32.totalorder %s32, 4
      %s34 = scalar_select %p33, 0, %s32
      %s35 = ssub.s32 %s22, %s34
      %p36 = scmp.eq.s32.totalorder %s35, 0
      %s38 = sadd.s32 %s37, 1
      %s39 = scalar_select %p36, %s37, %s38
      %p42 = pneg %p36
      %p43 = scmp.eq.s32.totalorder %s15, 3
      %p44 = por %p42, %p43
      %p45 = scmp.ne.s32.totalorder %s37, %s40
      %p46 = scmp.eq.s32.totalorder %s15, 0
      %p47 = por %p45, %p46
      %p48 = scmp.ne.s32.totalorder %s37, %s40
      %p49 = scmp.eq.s32.totalorder %s20, 3
      %p50 = por %p48, %p49
      %p51 = scmp.ne.s32.totalorder %s40, %s41
      %p52 = scmp.eq.s32.totalorder %s20, 0
      %p53 = por %p51, %p52
      %p54 = scmp.ne.s32.totalorder %s40, %s41
      %p55 = scmp.eq.s32.totalorder %s21, 3
      %p56 = por %p54, %p55
      %p58 = scmp.ne.s32.totalorder %s41, %s57
      %p59 = scmp.eq.s32.totalorder %s21, 0
      %p60 = por %p58, %p59
      %s61 = ssub.s32 %s22, %s34
      %s62 = ssub.s32 %s23, %s30
      %s63 = sor.u32 %s61, %s62
      %p64 = scmp.eq.s32.totalorder %s63, 0
      %s66 = sadd.s32 %s65, 1
      %s67 = scalar_select %p64, %s65, %s66
      %p70 = pneg %p64
      %p71 = scmp.eq.s32.totalorder %s15, 3
      %p72 = por %p70, %p71
      %p73 = scmp.ne.s32.totalorder %s65, %s68
      %p74 = scmp.eq.s32.totalorder %s15, 0
      %p75 = por %p73, %p74
      %p76 = scmp.ne.s32.totalorder %s65, %s68
      %p77 = scmp.eq.s32.totalorder %s20, 3
      %p78 = por %p76, %p77
      %p79 = scmp.ne.s32.totalorder %s68, %s69
      %p80 = scmp.eq.s32.totalorder %s20, 0
      %p81 = por %p79, %p80
      %p82 = scmp.ne.s32.totalorder %s68, %s69
      %p83 = scmp.eq.s32.totalorder %s21, 3
      %p84 = por %p82, %p83
      %p86 = scmp.ne.s32.totalorder %s69, %s85
      %p87 = scmp.eq.s32.totalorder %s21, 0
      %p88 = por %p86, %p87
      %s89 = ssub.s32 %s22, %s34
      %s90 = ssub.s32 %s23, %s30
      %s91 = sor.u32 %s89, %s90
      %p92 = scmp.eq.s32.totalorder %s91, 0
      %s94 = sadd.s32 %s93, 1
      %s95 = scalar_select %p92, %s93, %s94
      %p98 = pneg %p92
      %p99 = scmp.eq.s32.totalorder %s15, 3
      %p100 = por %p98, %p99
      %p101 = scmp.ne.s32.totalorder %s93, %s96
      %p102 = scmp.eq.s32.totalorder %s15, 0
      %p103 = por %p101, %p102
      %p104 = scmp.ne.s32.totalorder %s93, %s96
      %p105 = scmp.eq.s32.totalorder %s20, 3
      %p106 = por %p104, %p105
      %p107 = scmp.ne.s32.totalorder %s96, %s97
      %p108 = scmp.eq.s32.totalorder %s20, 0
      %p109 = por %p107, %p108
      %p110 = scmp.ne.s32.totalorder %s96, %s97
      %p111 = scmp.eq.s32.totalorder %s21, 3
      %p112 = por %p110, %p111
      %p114 = scmp.ne.s32.totalorder %s97, %s113
      %p115 = scmp.eq.s32.totalorder %s21, 0
      %p116 = por %p114, %p115
      %s117 = ssub.s32 %s22, %s34
      %s118 = ssub.s32 %s23, %s30
      %s119 = sor.u32 %s117, %s118
      %p120 = scmp.eq.s32.totalorder %s119, 0
      %s122 = sadd.s32 %s121, 1
      %s123 = scalar_select %p120, %s121, %s122
      %p126 = pneg %p120
      %p127 = scmp.eq.s32.totalorder %s15, 3
      %p128 = por %p126, %p127
      %p129 = scmp.ne.s32.totalorder %s121, %s124
      %p130 = scmp.eq.s32.totalorder %s15, 0
      %p131 = por %p129, %p130
      %p132 = scmp.ne.s32.totalorder %s121, %s124
      %p133 = scmp.eq.s32.totalorder %s20, 3
      %p134 = por %p132, %p133
      %p135 = scmp.ne.s32.totalorder %s124, %s125
      %p136 = scmp.eq.s32.totalorder %s20, 0
      %p137 = por %p135, %p136
      %p138 = scmp.ne.s32.totalorder %s124, %s125
      %p139 = scmp.eq.s32.totalorder %s21, 3
      %p140 = por %p138, %p139
      %p142 = scmp.ne.s32.totalorder %s125, %s141
      %p143 = scmp.eq.s32.totalorder %s21, 0
      %p144 = por %p142, %p143
      %p145 = scmp.le.s32.totalorder 1, %s15
      %p146 = scmp.lt.s32.totalorder %s15, 5
      %p147 = pnand %p145, %p146
      %p148 = pneg %p147
      // Predicated region
      $region9: #{tpu_custom_call.1} parent=5 // pred_check
        _
      $region10: #{tpu_custom_call.1} parent=5 // pred_check_branch
        %150 = sbr.rel (%p147) target = $region12
      $region11: #{tpu_custom_call.1} parent=5 // pred_region
        %s151 = ssub.s32 %s15, 1
      $region12: #{tpu_custom_call.1} parent=5 // pred_fallthru
        _
      %p152 = scmp.lt.s32.totalorder %s15, 4
      // Predicated region
      $region13: #{tpu_custom_call.1} parent=5 // pred_check
        %p153 = pneg %p152
      $region14: #{tpu_custom_call.1} parent=5 // pred_check_branch
        %155 = sbr.rel (%p153) target = $region16
      $region15: #{tpu_custom_call.1} parent=5 // pred_region
        // Predicated region
        $region17: #{tpu_custom_call.1} parent=15 // pred_check
          %p156 = pneg %p47
        $region18: #{tpu_custom_call.1} parent=15 // pred_check_branch
          %158 = sbr.rel (%p156) target = $region20
        $region19: #{tpu_custom_call.1} parent=15 // pred_region
          %p159 = scmp.lt.s32.totalorder %s22, 3
          %s160 = scalar_select %p159, %s22, 3
          %s161 = scalar_lea.vmem %s0, %s160
        $region20: #{tpu_custom_call.1} parent=15 // pred_fallthru
          _
        // Predicated region
        $region21: #{tpu_custom_call.1} parent=15 // pred_check
          %p162 = pneg %p75
        $region22: #{tpu_custom_call.1} parent=15 // pred_check_branch
          %164 = sbr.rel (%p162) target = $region24
        $region23: #{tpu_custom_call.1} parent=15 // pred_region
          %s165 = sand.u32 %s65, 1
          %s166 = scalar_lea.sflag [#allocation3], %s165
          %s167 = sand.u32 %s65, 1
          %s168 = smul.addr %s167, 64
          %s169 = scalar_lea.vmem [#allocation2], %s168
          %171 = vsyncadd %s166, 0
          %s172 = smul.addr %s22, 16
          %s173 = sadd.s32 %s23, %s172
          %s174 = smul.addr %s173, 4
          %s175 = scalar_lea.hbm %s1, %s174
          %s176 = sshll.u32 %s175, 4
          %s177 = int_to_ptr.hbm [resolvable:$true] %s176
          %s178 = sshll.u32 %s169, 4
          %s179 = int_to_ptr.vmem [resolvable:$true] %s178
          %184 = dma.hbm_to_vmem [thread:$0]  %s177, 1024, %s179, %s166, 64, 64, 4
        $region24: #{tpu_custom_call.1} parent=15 // pred_fallthru
          _
        // Predicated region
        $region25: #{tpu_custom_call.1} parent=15 // pred_check
          %p185 = pneg %p103
        $region26: #{tpu_custom_call.1} parent=15 // pred_check_branch
          %187 = sbr.rel (%p185) target = $region28
        $region27: #{tpu_custom_call.1} parent=15 // pred_region
          %p188 = scmp.lt.s32.totalorder %s22, 3
          %s189 = scalar_select %p188, %s22, 3
          %p190 = scmp.lt.s32.totalorder %s23, 0
          %s191 = scalar_select %p190, %s23, 0
          %s192 = sadd.s32 %s191, %s189
          %s193 = scalar_lea.vmem %s2, %s192
        $region28: #{tpu_custom_call.1} parent=15 // pred_fallthru
          _
      $region16: #{tpu_custom_call.1} parent=5 // pred_fallthru
        _
      %p194 = scmp.le.s32.totalorder 1, %s15
      %p195 = scmp.lt.s32.totalorder %s15, 5
      %p196 = pnand %p194, %p195
      %p197 = pneg %p196
      // Predicated region
      $region29: #{tpu_custom_call.1} parent=5 // pred_check
        _
      $region30: #{tpu_custom_call.1} parent=5 // pred_check_branch
        %199 = sbr.rel (%p196) target = $region32
      $region31: #{tpu_custom_call.1} parent=5 // pred_region
        %s200 = ssub.s32 %s15, 1
        %s201 = sand.u32 %s68, 1
        %s202 = scalar_lea.sflag [#allocation3], %s201
        %s203 = sand.u32 %s68, 1
        %s204 = smul.addr %s203, 64
        %s205 = scalar_lea.vmem [#allocation2], %s204
        // Predicated region
        $region33: #{tpu_custom_call.1} parent=31 // pred_check
          %p206 = pneg %p81
        $region34: #{tpu_custom_call.1} parent=31 // pred_check_branch
          %208 = sbr.rel (%p206) target = $region36
        $region35: #{tpu_custom_call.1} parent=31 // pred_region
          %210 = dma.done %s202, 1024
        $region36: #{tpu_custom_call.1} parent=31 // pred_fallthru
          _
        %p211 = scmp.lt.s32.totalorder %s24, 3
        %s212 = scalar_select %p211, %s24, 3
        %s213 = scalar_lea.vmem %s0, %s212
        %p214 = pneg %p53
        %p215 = pneg %p50
        %s216 = sand.u32 %s68, 1
        %s217 = scalar_lea.sflag [#allocation3], %s216
        %s218 = sand.u32 %s68, 1
        %s219 = smul.addr %s218, 64
        %s220 = scalar_lea.vmem [#allocation2], %s219
        %p221 = pneg %p81
        %p222 = pneg %p78
        %p223 = scmp.lt.s32.totalorder %s24, 3
        %s224 = scalar_select %p223, %s24, 3
        %p225 = scmp.lt.s32.totalorder %s25, 0
        %s226 = scalar_select %p225, %s25, 0
        %s227 = sadd.s32 %s226, %s224
        %s228 = scalar_lea.vmem %s2, %s227
        %p229 = pneg %p109
        %p230 = pneg %p106
        %p231 = pneg %p137
        %p232 = pneg %p134
        %s233 = sand.u32 %s124, 1
        %s234 = scalar_lea.sflag [#allocation4], %s233
        %s235 = sand.u32 %s124, 1
        %s236 = scalar_lea.vmem [#allocation5], %s235
        %p237 = scmp.lt.s32.totalorder %s24, 3
        %s238 = scalar_select %p237, %s24, 3
        %s239 = scalar_lea.vmem %s0, %s238
        %p240 = scmp.lt.s32.totalorder %s24, 3
        %s241 = scalar_select %p240, %s24, 3
        %p242 = scmp.lt.s32.totalorder %s25, 0
        %s243 = scalar_select %p242, %s25, 0
        %s244 = sadd.s32 %s243, %s241
        %s245 = scalar_lea.vmem %s2, %s244
        %v246 = vld [vmem:[%s239] sm:$0x1]
        %v247 = vld [vmem:[%s205] sm:$0xf]
        %v248 = vld [vmem:[%s205 + $0x4] sm:$0xf]
        %v249 = vld [vmem:[%s205 + $0x8] sm:$0xf]
        %v250 = vld [vmem:[%s205 + $0xc] sm:$0xf]
        %v251 = vld [vmem:[%s205 + $0x10] sm:$0xf]
        %v252 = vld [vmem:[%s205 + $0x14] sm:$0xf]
        %v253 = vld [vmem:[%s205 + $0x18] sm:$0xf]
        %v254 = vld [vmem:[%s205 + $0x1c] sm:$0xf]
        %v255 = vld [vmem:[%s205 + $0x20] sm:$0xf]
        %v256 = vld [vmem:[%s205 + $0x24] sm:$0xf]
        %v257 = vld [vmem:[%s205 + $0x28] sm:$0xf]
        %v258 = vld [vmem:[%s205 + $0x2c] sm:$0xf]
        %v259 = vld [vmem:[%s205 + $0x30] sm:$0xf]
        %v260 = vld [vmem:[%s205 + $0x34] sm:$0xf]
        %v261 = vld [vmem:[%s205 + $0x38] sm:$0xf]
        %v262 = vld [vmem:[%s205 + $0x3c] sm:$0xf]
        %v263 = vld [vmem:[%s245] sm:$0x1]
        %v280 = vunpack.c.l.b16 %v247
        %v281 = vunpack.c.l.b16 %v248
        %v282 = vunpack.c.l.b16 %v249
        %v283 = vunpack.c.l.b16 %v250
        %v284 = vunpack.c.l.b16 %v251
        %v285 = vunpack.c.l.b16 %v252
        %v286 = vunpack.c.l.b16 %v253
        %v287 = vunpack.c.l.b16 %v254
        %v288 = vunpack.c.l.b16 %v255
        %v289 = vunpack.c.l.b16 %v256
        %v290 = vunpack.c.l.b16 %v257
        %v291 = vunpack.c.l.b16 %v258
        %v292 = vunpack.c.l.b16 %v259
        %v293 = vunpack.c.l.b16 %v260
        %v294 = vunpack.c.l.b16 %v261
        %v295 = vunpack.c.l.b16 %v262
        %v296 = vpack.c.b16 %v281, %v280
        %v297 = vpack.c.b16 %v283, %v282
        %v298 = vpack.c.b16 %v285, %v284
        %v299 = vpack.c.b16 %v287, %v286
        %v300 = vpack.c.b16 %v289, %v288
        %v301 = vpack.c.b16 %v291, %v290
        %v302 = vpack.c.b16 %v293, %v292
        %v303 = vpack.c.b16 %v295, %v294
        %312 = vmatpush.bf16.msra.mxu0 %v303
        %313 = vmatpush.bf16.msra.mxu0 %v302
        %314 = vmatpush.bf16.msra.mxu0 %v301
        %315 = vmatpush.bf16.msra.mxu0 %v300
        %316 = vmatpush.bf16.msra.mxu0 %v299
        %317 = vmatpush.bf16.msra.mxu0 %v298
        %318 = vmatpush.bf16.msra.mxu0 %v297
        %319 = vmatpush.bf16.msra.mxu0 %v296
        %320 = vmatmul.bf16.gmra.mxu0 %v246
        %v321 = vpop.f32.mrf.mxu0
        %v322 = vadd.f32 %v263, %v321
        %v323 = vpop.f32.mrf.mxu0
        %324 = vdwg.mxu0
        %325 = vst [vmem:[%s236] sm:$0x1] %v322
        %s326 = sand.u32 %s124, 1
        %s327 = scalar_lea.sflag [#allocation4], %s326
        %s328 = sand.u32 %s124, 1
        %s329 = scalar_lea.vmem [#allocation5], %s328
        // Predicated region
        $region37: #{tpu_custom_call.1} parent=31 // pred_check
          %p330 = pneg %p134
        $region38: #{tpu_custom_call.1} parent=31 // pred_check_branch
          %332 = sbr.rel (%p330) target = $region40
        $region39: #{tpu_custom_call.1} parent=31 // pred_region
          %334 = vsyncadd %s327, 0
          %s335 = sadd.s32 %s25, %s24
          %s336 = scalar_lea.hbm %s3, %s335
          %s338 = sshll.u32 %s329, 4
          %s339 = int_to_ptr.vmem [resolvable:$true] %s338
          %s340 = sshll.u32 %s336, 4
          %s341 = int_to_ptr.hbm [resolvable:$true] %s340
          %343 = dma.vmem_to_hbm [thread:$0]  %s339, 16, %s341, %s327
        $region40: #{tpu_custom_call.1} parent=31 // pred_fallthru
          _
      $region32: #{tpu_custom_call.1} parent=5 // pred_fallthru
        _
      %p344 = scmp.le.s32.totalorder 2, %s15
      // Predicated region
      $region41: #{tpu_custom_call.1} parent=5 // pred_check
        %p345 = pneg %p344
      $region42: #{tpu_custom_call.1} parent=5 // pred_check_branch
        %347 = sbr.rel (%p345) target = $region44
      $region43: #{tpu_custom_call.1} parent=5 // pred_region
        %s348 = ssub.s32 %s15, 2
        // Predicated region
        $region45: #{tpu_custom_call.1} parent=43 // pred_check
          %p349 = pneg %p140
        $region46: #{tpu_custom_call.1} parent=43 // pred_check_branch
          %351 = sbr.rel (%p349) target = $region48
        $region47: #{tpu_custom_call.1} parent=43 // pred_region
          %s352 = sand.u32 %s125, 1
          %s353 = scalar_lea.sflag [#allocation4], %s352
          %s354 = sand.u32 %s125, 1
          %s355 = scalar_lea.vmem [#allocation5], %s354
          %357 = dma.done %s353, 16
        $region48: #{tpu_custom_call.1} parent=43 // pred_fallthru
          _
      $region44: #{tpu_custom_call.1} parent=5 // pred_fallthru
        _
    $region6: #{tpu_custom_call.1} parent=1 // loop_footer
      %s19 = sadd.s32 1, %s15
    $region7: #{tpu_custom_call.1} parent=1 // loop_footer_branch
      %14 = sbr.rel target = $region3
    $region8: #{tpu_custom_call.1} parent=1 // loop_exit
      _
    %358 = vsyncpa [#allocation3], 1
    %s359 = scalar_lea.sflag [#allocation3], 1
    %360 = vsyncpa %s359, 1
    %361 = vsyncpa [#allocation4], 1
    %s362 = scalar_lea.sflag [#allocation4], 1
    %363 = vsyncpa %s362, 1

</llo_original>
